<compile_context>
chip_gen: v7x
topology: tpu7x:2x2x1
jax: 0.10.0
libtpu: 0.0.40
codegen_flags: <defaults>
</compile_context>

<pallas_src>
import math
import functools

import jax
import jax.numpy as jnp
from jax.experimental import pallas as pl
from jax.experimental.pallas import tpu as pltpu


# ----------------------------- tiling helpers -----------------------------

_MIB = 1024 * 1024


def _pick_tile(dim, max_tile, align):
    """Largest tile <= max_tile dividing `dim` (preferring `align` multiples).

    Falls back to the full dim only when the dim itself is <= max_tile, so a
    large awkward dim can never silently become a single huge block."""
    if dim <= max_tile:
        return dim
    best = None
    for t in range(max_tile, 0, -1):
        if dim % t == 0:
            if t % align == 0:
                return t
            if best is None:
                best = t
    return best if best is not None else dim


def _seq_row_tile(seq_len, max_rows=256):
    """Row tile for the QKV projection: must divide S so a row block never
    straddles a batch boundary (the output is scattered per (batch, head))."""
    for t in range(min(seq_len, max_rows), 0, -1):
        if seq_len % t == 0 and (t % 8 == 0 or t == seq_len):
            return t
    return seq_len


def _clamp_vmem(nbytes):
    """Explicit scoped-VMEM budget: tiles + compiler-scratch margin, capped at
    48 MiB so we never request all of v7x's 64 MiB per TensorCore."""
    return int(min(max(nbytes + 4 * _MIB, 8 * _MIB), 48 * _MIB))


# ----------------------------- Pallas kernels -----------------------------

def _dense_kernel(*refs, activation, fuse_ln, nk, eps=1e-12):
    """out = act(x @ w + b)   or   LayerNorm(x @ w + b + residual).

    Ref layout (size-1 leading block dims squeezed away by the BlockSpecs):
      fuse_ln=False: x(tm,tk) w(tk,tn) b(1,tn) out(tm,tn) [acc(tm,tn) if nk>1]
      fuse_ln=True : x w b r(tm,tn) g(1,tn) bb(1,tn) out [acc]
    The f32 accumulator is bypassed entirely when the K grid has one step
    (saves the zero-init + extra VMEM store traffic; matters most on v5e's
    single vector-store slot)."""
    if fuse_ln:
        x_ref, w_ref, b_ref, r_ref, g_ref, bb_ref, o_ref = refs[:7]
        acc_ref = refs[7] if nk > 1 else None
    else:
        x_ref, w_ref, b_ref, o_ref = refs[:4]
        acc_ref = refs[4] if nk > 1 else None
        r_ref = g_ref = bb_ref = None

    def _finalize(y):                               # y: f32 (tm, tn)
        y = y + b_ref[...]
        if activation == "gelu":
            # TODO(synk): HF's default hidden_act="gelu" is the exact erf GELU;
            # the tanh approximation (original BERT) is used here.
            c = math.sqrt(2.0 / math.pi)
            y = 0.5 * y * (1.0 + jnp.tanh(c * (y + 0.044715 * y * y * y)))
        if fuse_ln:
            y = y + r_ref[...].astype(jnp.float32)
            mu = jnp.mean(y, axis=-1, keepdims=True)
            yc = y - mu
            var = jnp.mean(yc * yc, axis=-1, keepdims=True)
            y = yc * jax.lax.rsqrt(var + eps) * g_ref[...] + bb_ref[...]
        o_ref[...] = y.astype(o_ref.dtype)

    if nk == 1:
        _finalize(jnp.dot(x_ref[...], w_ref[...],
                          preferred_element_type=jnp.float32))
    else:
        @pl.when(pl.program_id(2) == 0)
        def _():
            acc_ref[...] = jnp.zeros_like(acc_ref)

        acc_ref[...] += jnp.dot(x_ref[...], w_ref[...],
                                preferred_element_type=jnp.float32)

        @pl.when(pl.program_id(2) == nk - 1)
        def _():
            _finalize(acc_ref[...])


def _ln_kernel(x_ref, g_ref, b_ref, o_ref, *, eps=1e-12):
    """Standalone LayerNorm (embedding LN only; per-layer LNs are fused into
    the dense epilogues)."""
    x = x_ref[...].astype(jnp.float32)
    mu = jnp.mean(x, axis=-1, keepdims=True)
    xc = x - mu
    var = jnp.mean(xc * xc, axis=-1, keepdims=True)
    o_ref[...] = (xc * jax.lax.rsqrt(var + eps) * g_ref[...]
                  + b_ref[...]).astype(o_ref.dtype)


def _attention_kernel(m_ref, qkv_ref, o_ref, *, nh, hd, scale):
    """Multi-head self-attention for one batch element.

    qkv_ref: (nh, S, 3*hd) bf16, per-head fused [q | k | v] (head-major layout
             written directly by qkv_dense -- per-head access is a free
             leading-axis index, not a 64-lane slice of a 3H-wide row).
    m_ref  : (1, S)  f32 additive key mask, shared by all heads.
    o_ref  : (S, H)  output block; each head writes its static hd-wide column
             slice as soon as it is produced (no live per-head buffer list,
             no concatenate) and the HBM write-back stays lane-dense.
    """
    mask = m_ref[...]                                  # (1, S) f32
    for h in range(nh):                                # static unroll
        qkv_h = qkv_ref[h]                             # (S, 3*hd) bf16
        q = qkv_h[:, 0 * hd:1 * hd] * scale            # fold 1/sqrt(hd) into q
        k = qkv_h[:, 1 * hd:2 * hd]
        v = qkv_h[:, 2 * hd:3 * hd]
        # scores: contract the last dims directly (no k.T through the XLU)
        s = jax.lax.dot_general(q, k, (((1,), (1,)), ((), ())),
                                preferred_element_type=jnp.float32)
        s = s + mask                                   # mask keys, f32
        s = s - jnp.max(s, axis=-1, keepdims=True)
        p = jnp.exp(s)
        p = p * pl.reciprocal(jnp.sum(p, axis=-1, keepdims=True), approx=True)
        ctx = jnp.dot(p.astype(v.dtype), v, preferred_element_type=jnp.float32)
        o_ref[:, h * hd:(h + 1) * hd] = ctx.astype(o_ref.dtype)
    # TODO(synk): for S >= ~1024 (esp. v7x's 64 MiB VMEM) switch to a KV-tiled
    # flash-style online-softmax loop with heads on the grid instead of
    # materializing the (S, S) score matrix per head.


# ----------------------------- Pallas wrappers -----------------------------

def dense(x, w, b, activation=None, residual=None, ln_gamma=None, ln_beta=None,
          out_dtype=jnp.bfloat16, eps=1e-12):
    """y = act(x @ w + b), optionally fused with residual-add + LayerNorm."""
    M, K = x.shape
    N = w.shape[1]
    fuse_ln = residual is not None

    tm = _pick_tile(M, 512, 8)
    # The residual+LayerNorm epilogue needs the whole row resident, so tn == N
    # there (N == hidden <= 1024 for BERT => f32 acc is at most ~2 MiB).
    tn = N if fuse_ln else _pick_tile(N, 1024, 128)
    tk = _pick_tile(K, 1536, 128)
    nk = K // tk
    grid = (M // tm, N // tn, nk)

    kernel = functools.partial(_dense_kernel, activation=activation,
                               fuse_ln=fuse_ln, nk=nk, eps=eps)

    in_specs = [pl.BlockSpec((tm, tk), lambda i, j, k: (i, k)),
                pl.BlockSpec((tk, tn), lambda i, j, k: (k, j)),
                pl.BlockSpec((1, tn), lambda i, j, k: (0, j))]
    args = [x.astype(jnp.bfloat16), w.astype(jnp.bfloat16),
            jnp.reshape(b, (1, N)).astype(jnp.float32)]
    if fuse_ln:
        in_specs += [pl.BlockSpec((tm, tn), lambda i, j, k: (i, j)),
                     pl.BlockSpec((1, tn), lambda i, j, k: (0, j)),
                     pl.BlockSpec((1, tn), lambda i, j, k: (0, j))]
        args += [residual.astype(jnp.bfloat16),
                 jnp.reshape(ln_gamma, (1, N)).astype(jnp.float32),
                 jnp.reshape(ln_beta, (1, N)).astype(jnp.float32)]
    scratch = [] if nk == 1 else [pltpu.VMEM((tm, tn), jnp.float32)]

    out_bytes = jnp.dtype(out_dtype).itemsize
    vmem = (2 * tm * tk * 2 + 2 * tk * tn * 2 + 2 * tm * tn * out_bytes
            + (tm * tn * 4 if nk > 1 else 0)
            + (2 * tm * tn * 2 if fuse_ln else 0)
            + 2 * tm * tn * 4)                       # f32 epilogue temporaries

    return pl.pallas_call(
        kernel,
        out_shape=jax.ShapeDtypeStruct((M, N), out_dtype),
        grid_spec=pltpu.PrefetchScalarGridSpec(
            num_scalar_prefetch=0,
            grid=grid,
            in_specs=in_specs,
            out_specs=pl.BlockSpec((tm, tn), lambda i, j, k: (i, j)),
            scratch_shapes=scratch),
        compiler_params=pltpu.CompilerParams(
            dimension_semantics=("parallel", "parallel", "arbitrary"),
            vmem_limit_bytes=_clamp_vmem(vmem)),
    )(*args)


def qkv_dense(x, w3, b3, B, S, out_dtype=jnp.bfloat16):
    """Fused QKV projection that writes a head-major (B, nh, S, 3*hd) tensor
    directly (no plain-JAX transpose; the attention kernel slices heads on a
    leading axis for free).

    x : (B*S, H) activations; w3: (nh, H, 3*hd) head-major fused weight;
    b3: (nh, 1, 3*hd) bias."""
    M, K = x.shape
    nh, _, d3 = w3.shape

    tm = _seq_row_tile(S, 256)                     # row block within one batch
    tk = _pick_tile(K, 1536, 128)
    nk = K // tk
    spt = S // tm
    grid = (B * spt, nh, nk)

    kernel = functools.partial(_dense_kernel, activation=None,
                               fuse_ln=False, nk=nk)

    vmem = (2 * tm * tk * 2 + 2 * tk * d3 * 2 + 2 * tm * d3 * 2
            + (tm * d3 * 4 if nk > 1 else 0) + 2 * tm * d3 * 4)

    return pl.pallas_call(
        kernel,
        out_shape=jax.ShapeDtypeStruct((B, nh, S, d3), out_dtype),
        grid_spec=pltpu.PrefetchScalarGridSpec(
            num_scalar_prefetch=0,
            grid=grid,
            in_specs=[pl.BlockSpec((tm, tk), lambda i, j, k: (i, k)),
                      pl.BlockSpec((None, tk, d3), lambda i, j, k: (j, k, 0)),
                      pl.BlockSpec((None, 1, d3), lambda i, j, k: (j, 0, 0))],
            out_specs=pl.BlockSpec(
                (None, None, tm, d3),
                lambda i, j, k: (i // spt, j, i % spt, 0)),
            scratch_shapes=[] if nk == 1
            else [pltpu.VMEM((tm, d3), jnp.float32)]),
        compiler_params=pltpu.CompilerParams(
            dimension_semantics=("parallel", "parallel", "arbitrary"),
            vmem_limit_bytes=_clamp_vmem(vmem)),
    )(x.astype(jnp.bfloat16), w3.astype(jnp.bfloat16), b3.astype(jnp.float32))


def attention(qkv, add_mask, nh, hd):
    """qkv: (B, nh, S, 3*hd) bf16 head-major projections;
    add_mask: (B, 1, S) f32 additive mask  ->  (B, S, H) bf16 context."""
    B, _, S, d3 = qkv.shape
    H = nh * hd
    kernel = functools.partial(_attention_kernel, nh=nh, hd=hd,
                               scale=1.0 / math.sqrt(hd))

    vmem = (2 * nh * S * d3 * 2          # qkv block, double-buffered
            + 2 * S * H * 2              # resident output block
            + 2 * S * 4                  # mask
            + 6 * S * S * 4              # f32 score / prob temporaries
            + 2 * S * hd * 4)            # f32 per-head context

    return pl.pallas_call(
        kernel,
        out_shape=jax.ShapeDtypeStruct((B, S, H), jnp.bfloat16),
        grid=(B,),
        in_specs=[pl.BlockSpec((None, 1, S), lambda b: (b, 0, 0)),
                  pl.BlockSpec((None, nh, S, d3), lambda b: (b, 0, 0, 0))],
        out_specs=pl.BlockSpec((None, S, H), lambda b: (b, 0, 0)),
        compiler_params=pltpu.CompilerParams(
            dimension_semantics=("parallel",),
            vmem_limit_bytes=_clamp_vmem(vmem)),
    )(add_mask, qkv)


def layer_norm(x, gamma, beta, out_dtype=jnp.bfloat16):
    """Row-tiled LayerNorm (embedding LN only)."""
    M, H = x.shape
    tm = _pick_tile(M, 512, 8)           # capped at 512: v5e scoped-VMEM safe
    grid = (M // tm,)
    row_spec = pl.BlockSpec((tm, H), lambda i: (i, 0))
    vec_spec = pl.BlockSpec((1, H), lambda i: (0, 0))
    vmem = 2 * tm * H * x.dtype.itemsize + 2 * tm * H * 2 + 3 * tm * H * 4
    return pl.pallas_call(
        _ln_kernel,
        out_shape=jax.ShapeDtypeStruct((M, H), out_dtype),
        grid=grid,
        in_specs=[row_spec, vec_spec, vec_spec],
        out_specs=row_spec,
        compiler_params=pltpu.CompilerParams(
            dimension_semantics=("parallel",),
            vmem_limit_bytes=_clamp_vmem(vmem)),
    )(x, jnp.reshape(gamma, (1, H)).astype(jnp.float32),
      jnp.reshape(beta, (1, H)).astype(jnp.float32))


# ----------------------------- BERT model -----------------------------

def init_params(key, cfg):
    H, I = cfg["hidden"], cfg["intermediate"]
    nh = cfg["heads"]
    hd = H // nh

    def nrm(k, shape):
        return (jax.random.normal(k, shape, jnp.float32) * 0.02).astype(
            jnp.bfloat16)

    keys = iter(jax.random.split(key, 8 + 8 * cfg["layers"]))
    params = {
        "word_emb": nrm(next(keys), (cfg["vocab"], H)),
        "pos_emb": nrm(next(keys), (cfg["max_pos"], H)),
        "type_emb": nrm(next(keys), (cfg["type_vocab"], H)),
        "emb_ln_g": jnp.ones((1, H), jnp.float32),
        "emb_ln_b": jnp.zeros((1, H), jnp.float32),
        "layers": [],
        "cls_w": nrm(next(keys), (H, cfg["num_labels"])),
        "cls_b": jnp.zeros((cfg["num_labels"],), jnp.float32),
    }
    for _ in range(cfg["layers"]):
        params["layers"].append({
            # Head-major fused QKV weight (one-time permutation of [Wq|Wk|Wv]):
            #   wqkv[h, :, 0:hd]    = Wq columns of head h
            #   wqkv[h, :, hd:2hd]  = Wk columns of head h
            #   wqkv[h, :, 2hd:3hd] = Wv columns of head h
            "wqkv": nrm(next(keys), (nh, H, 3 * hd)),
            "bqkv": jnp.zeros((nh, 1, 3 * hd), jnp.float32),
            "wo": nrm(next(keys), (H, H)), "bo": jnp.zeros((H,), jnp.float32),
            "ln1_g": jnp.ones((H,), jnp.float32),
            "ln1_b": jnp.zeros((H,), jnp.float32),
            "wi": nrm(next(keys), (H, I)), "bi": jnp.zeros((I,), jnp.float32),
            "wo2": nrm(next(keys), (I, H)), "bo2": jnp.zeros((H,), jnp.float32),
            "ln2_g": jnp.ones((H,), jnp.float32),
            "ln2_b": jnp.zeros((H,), jnp.float32),
        })
    return params


def bert_encoder(params, input_ids, token_type_ids, attention_mask, cfg):
    B, S = input_ids.shape
    H = cfg["hidden"]
    nh = cfg["heads"]
    hd = H // nh

    # --- embeddings (gathers are plain-JAX glue) ---
    pos_ids = jnp.arange(S)
    emb = (jnp.take(params["word_emb"], input_ids, axis=0).astype(jnp.float32)
           + jnp.take(params["pos_emb"], pos_ids,
                      axis=0)[None, :, :].astype(jnp.float32)
           + jnp.take(params["type_emb"], token_type_ids,
                      axis=0).astype(jnp.float32))
    x = layer_norm(emb.reshape(B * S, H),
                   params["emb_ln_g"], params["emb_ln_b"])     # (B*S, H) bf16
    # TODO(synk): dropout layers are identity at inference; no RNG masking.

    # Additive attention mask kept as (B, 1, S); broadcast across heads for
    # free inside the attention kernel.
    add_mask = ((1.0 - attention_mask.astype(jnp.float32))
                * -10000.0)[:, None, :]

    for lyr in params["layers"]:
        # --- self attention: fused head-major QKV, per-batch attention ---
        qkv = qkv_dense(x, lyr["wqkv"], lyr["bqkv"], B=B, S=S)  # (B,nh,S,3hd)
        ctx = attention(qkv, add_mask, nh, hd)                  # (B, S, H)
        # output projection with residual-add + LayerNorm fused in the epilogue
        x = dense(ctx.reshape(B * S, H), lyr["wo"], lyr["bo"],
                  residual=x, ln_gamma=lyr["ln1_g"], ln_beta=lyr["ln1_b"])

        # --- feed forward (GELU fused; second matmul fuses residual + LN) ---
        inter = dense(x, lyr["wi"], lyr["bi"], activation="gelu")
        x = dense(inter, lyr["wo2"], lyr["bo2"],
                  residual=x, ln_gamma=lyr["ln2_g"], ln_beta=lyr["ln2_b"])

    return x.reshape(B, S, H)


def bert_for_sequence_classification(params, cfg, input_ids,
                                     token_type_ids=None,
                                     attention_mask=None):
    if token_type_ids is None:
        token_type_ids = jnp.zeros_like(input_ids)
    if attention_mask is None:
        attention_mask = jnp.ones_like(input_ids)

    sequence_output = bert_encoder(params, input_ids, token_type_ids,
                                   attention_mask, cfg)        # (B, S, H)
    pooled_output = sequence_output[:, 0]                      # (B, H)
    # dropout -> identity at inference; the spec module has no pooler: the raw
    # [CLS] hidden state goes straight into the classifier.
    logits = dense(pooled_output, params["cls_w"], params["cls_b"],
                   out_dtype=jnp.float32)
    return logits                                              # (B, num_labels)


# ----------------------------- demo -----------------------------

if __name__ == "__main__":
    cfg = dict(vocab=50, hidden=32, heads=2, layers=2, intermediate=64,
               max_pos=32, type_vocab=2, num_labels=3)
    B, S = 2, 8

    key = jax.random.PRNGKey(0)
    k_param, k_ids = jax.random.split(key)
    params = init_params(k_param, cfg)

    input_ids = jax.random.randint(k_ids, (B, S), 0, cfg["vocab"],
                                   dtype=jnp.int32)
    token_type_ids = jnp.zeros((B, S), jnp.int32)
    attention_mask = jnp.ones((B, S), jnp.int32).at[1, 6:].set(0)  # pad tail

    logits = bert_for_sequence_classification(
        params, cfg, input_ids, token_type_ids, attention_mask)
    jax.block_until_ready(logits)
    assert logits.shape == (B, cfg["num_labels"])
    print("KERNEL_OK")
</pallas_src>

<mosaic_0001>
module attributes {stable_mosaic.version = 11 : i64} {
  func.func @_ln_kernel(%arg0: i32, %arg1: memref<16x32xf32, #tpu.memory_space<vmem>>, %arg2: memref<1x32xf32, #tpu.memory_space<vmem>>, %arg3: memref<1x32xf32, #tpu.memory_space<vmem>>, %arg4: memref<16x32xbf16, #tpu.memory_space<vmem>>) attributes {dimension_semantics = [#tpu.dimension_semantics<parallel>], iteration_bounds = array<i64: 1>, scalar_prefetch = 0 : i64, scratch_operands = 0 : i64, tpu.core_type = #tpu.core_type<tc>, window_params = [{transform_indices = @transform_0, window_bounds = array<i64: 16, 32>}, {pipeline_mode = #tpu.pipeline_mode<synchronous>, transform_indices = @transform_1, window_bounds = array<i64: 1, 32>}, {pipeline_mode = #tpu.pipeline_mode<synchronous>, transform_indices = @transform_2, window_bounds = array<i64: 1, 32>}, {transform_indices = @transform_3, window_bounds = array<i64: 16, 32>}]} {
    %c0 = arith.constant 0 : index
    %c0_0 = arith.constant 0 : index
    %0 = vector.load %arg1[%c0, %c0_0] : memref<16x32xf32, #tpu.memory_space<vmem>>, vector<16x32xf32>
    %cst = arith.constant dense<0.000000e+00> : vector<16xf32>
    %1 = vector.multi_reduction <add>, %0, %cst [1] : vector<16x32xf32> to vector<16xf32>
    %2 = vector.shape_cast %1 : vector<16xf32> to vector<16x1xf32>
    %cst_1 = arith.constant 3.200000e+01 : f32
    %3 = vector.broadcast %cst_1 : f32 to vector<16x1xf32>
    %4 = arith.divf %2, %3 : vector<16x1xf32>
    %5 = vector.broadcast %4 : vector<16x1xf32> to vector<16x32xf32>
    %6 = arith.subf %0, %5 : vector<16x32xf32>
    %7 = arith.mulf %6, %6 : vector<16x32xf32>
    %cst_2 = arith.constant dense<0.000000e+00> : vector<16xf32>
    %8 = vector.multi_reduction <add>, %7, %cst_2 [1] : vector<16x32xf32> to vector<16xf32>
    %9 = vector.shape_cast %8 : vector<16xf32> to vector<16x1xf32>
    %cst_3 = arith.constant 3.200000e+01 : f32
    %10 = vector.broadcast %cst_3 : f32 to vector<16x1xf32>
    %11 = arith.divf %9, %10 : vector<16x1xf32>
    %cst_4 = arith.constant 9.99999996E-13 : f32
    %12 = vector.broadcast %cst_4 : f32 to vector<16x1xf32>
    %13 = arith.addf %11, %12 : vector<16x1xf32>
    %14 = math.rsqrt %13 : vector<16x1xf32>
    %15 = vector.broadcast %14 : vector<16x1xf32> to vector<16x32xf32>
    %16 = arith.mulf %6, %15 : vector<16x32xf32>
    %c0_5 = arith.constant 0 : index
    %c0_6 = arith.constant 0 : index
    %17 = vector.load %arg2[%c0_5, %c0_6] : memref<1x32xf32, #tpu.memory_space<vmem>>, vector<1x32xf32>
    %18 = vector.broadcast %17 : vector<1x32xf32> to vector<16x32xf32>
    %19 = arith.mulf %16, %18 : vector<16x32xf32>
    %c0_7 = arith.constant 0 : index
    %c0_8 = arith.constant 0 : index
    %20 = vector.load %arg3[%c0_7, %c0_8] : memref<1x32xf32, #tpu.memory_space<vmem>>, vector<1x32xf32>
    %21 = vector.broadcast %20 : vector<1x32xf32> to vector<16x32xf32>
    %22 = arith.addf %19, %21 : vector<16x32xf32>
    %23 = arith.truncf %22 : vector<16x32xf32> to vector<16x32xbf16>
    %c0_9 = arith.constant 0 : index
    %c0_10 = arith.constant 0 : index
    %24 = vector.load %arg4[%c0_9, %c0_10] : memref<16x32xbf16, #tpu.memory_space<vmem>>, vector<16x32xbf16>
    tpu.vector_store %arg4[%c0_9, %c0_10], %23 {strides = array<i32>} : memref<16x32xbf16, #tpu.memory_space<vmem>>, vector<16x32xbf16>,
    return
  }
  func.func @transform_0(%arg0: i32) -> (i32, i32) {
    %c0_i32 = arith.constant 0 : i32
    %c0_i32_0 = arith.constant 0 : i32
    return %arg0, %c0_i32 : i32, i32
  }
  func.func @transform_1(%arg0: i32) -> (i32, i32) {
    %c0_i32 = arith.constant 0 : i32
    %c0_i32_0 = arith.constant 0 : i32
    %c0_i32_1 = arith.constant 0 : i32
    return %c0_i32, %c0_i32_0 : i32, i32
  }
  func.func @transform_2(%arg0: i32) -> (i32, i32) {
    %c0_i32 = arith.constant 0 : i32
    %c0_i32_0 = arith.constant 0 : i32
    %c0_i32_1 = arith.constant 0 : i32
    return %c0_i32, %c0_i32_0 : i32, i32
  }
  func.func @transform_3(%arg0: i32) -> (i32, i32) {
    %c0_i32 = arith.constant 0 : i32
    %c0_i32_0 = arith.constant 0 : i32
    return %arg0, %c0_i32 : i32, i32
  }
}

</mosaic_0001>

<llo_original>
// kernel: tpu_custom_call.1
$region0: #{tpu_custom_call.1}
  #allocation0 [shape = 'u32[]', space=smem, size = 0x4, offset = 0x4, fixed_abs, tag = 'smem constant byte address 0x4 - core index']
  #allocation1 [shape = 'u32[144,128]{1,0:T(1,128)}', space=vmem, size = 0x12000, scoped, tag = 'internal scratch']
  %s0 = inlined_call_operand.hbm [shape: f32[16,32], index: 0, kind: input, shape index: {}]
  %s1 = inlined_call_operand.vmem [shape: f32[1,32], index: 1, kind: input, shape index: {}]
  %s2 = inlined_call_operand.vmem [shape: f32[1,32], index: 2, kind: input, shape index: {}]
  %s3 = inlined_call_operand.hbm [shape: bf16[16,32], index: 3, kind: output, shape index: {}]
  %s4 = sld [smem:[#allocation0]]
  $region26: #{tpu_custom_call.1} parent=0
    _
  %s6 = ssub.s32 1, %s4
  %s7 = scalar_select 0, %s6, %s4
  $region1: #{tpu_custom_call.1} parent=0
    #allocation2 [shape = 'u8[8192]{0}', space=vmem, size = 0x2000, scoped, tag = 'input window, operand 0, single buffered']
    #allocation3 [shape = 's32[1]{0}', space=sflag, size = 0x4, scoped, tag = 'scoped memory for tpu_custom_call.1']
    #allocation4 [shape = 's32[1]{0}', space=sflag, size = 0x4, scoped, tag = 'scoped memory for tpu_custom_call.1']
    #allocation5 [shape = 'u8[4096]{0}', space=vmem, size = 0x1000, scoped, tag = 'output window, operand 0, single buffered']
    %8 = vsyncpa [#allocation3], 0
    %9 = vsyncpa [#allocation4], 0
    // Predicated region
    $region2: #{tpu_custom_call.1} parent=1 // pred_check
      _
    $region3: #{tpu_custom_call.1} parent=1 // pred_check_branch
      %11 = sbr.rel (0) target = $region5
    $region4: #{tpu_custom_call.1} parent=1 // pred_region
      %s13 = ssub.s32 256, 256
      %14 = vsyncadd [#allocation3], %s13
      %s15 = sshll.u32 [#allocation2], 4
      %s16 = int_to_ptr.vmem [resolvable:$true] %s15
      %21 = dma.hbm_to_vmem [thread:$0]  %s0, 256, %s16, [#allocation3], 128, 128, 8
    $region5: #{tpu_custom_call.1} parent=1 // pred_fallthru
      _
    // Predicated region
    $region6: #{tpu_custom_call.1} parent=1 // pred_check
      _
    $region7: #{tpu_custom_call.1} parent=1 // pred_check_branch
      %23 = sbr.rel (0) target = $region9
    $region8: #{tpu_custom_call.1} parent=1 // pred_region
      _
    $region9: #{tpu_custom_call.1} parent=1 // pred_fallthru
      _
    // Predicated region
    $region10: #{tpu_custom_call.1} parent=1 // pred_check
      _
    $region11: #{tpu_custom_call.1} parent=1 // pred_check_branch
      %25 = sbr.rel (0) target = $region13
    $region12: #{tpu_custom_call.1} parent=1 // pred_region
      _
    $region13: #{tpu_custom_call.1} parent=1 // pred_fallthru
      _
    // Predicated region
    $region14: #{tpu_custom_call.1} parent=1 // pred_check
      _
    $region15: #{tpu_custom_call.1} parent=1 // pred_check_branch
      %27 = sbr.rel (0) target = $region17
    $region16: #{tpu_custom_call.1} parent=1 // pred_region
      %28 = dma.done [#allocation3], 256
    $region17: #{tpu_custom_call.1} parent=1 // pred_fallthru
      _
    %v29 = vld [vmem:[#allocation2] sm:$0xff]
    %v30 = vld [vmem:[#allocation2 + $0x8] sm:$0xff]
    %vm31 = vcmask 261120
    %v32 = vsel %vm31, %v29, 0.0
    %33 = vadd.xlane.f32.xlu0 %v32
    %v34 = vpop.xlane.xlu0 %33
    %v35 = vsel %vm31, %v30, 0.0
    %36 = vadd.xlane.f32.xlu0 %v35
    %v37 = vpop.xlane.xlu0 %36
    %v38 = vrcp.pop 32.0
    %v39 = vmul.f32 %v34, %v38
    %v40 = vmul.f32 %v37, %v38
    %v41 = vsub.f32 %v29, %v39
    %v42 = vsub.f32 %v30, %v40
    %v43 = vmul.f32 %v41, %v41
    %v44 = vmul.f32 %v42, %v42
    %v45 = vsel %vm31, %v43, 0.0
    %46 = vadd.xlane.f32.xlu0 %v45
    %v47 = vpop.xlane.xlu0 %46
    %v48 = vsel %vm31, %v44, 0.0
    %49 = vadd.xlane.f32.xlu0 %v48
    %v50 = vpop.xlane.xlu0 %49
    %v51 = vmul.f32 %v47, %v38
    %v52 = vmul.f32 %v50, %v38
    %v53 = vadd.f32 %v51, 1e-12
    %v54 = vadd.f32 %v52, 1e-12
    %v55 = vrsqrt.pop %v53
    %v56 = vrsqrt.pop %v54
    %v57 = vmul.f32 %v41, %v55
    %v58 = vmul.f32 %v42, %v56
    %v59 = vld [vmem:[%s1] sm:$0x1]
    %v61 = vlaneseq
    %v62 = vshrl.u32 %v61, 7
    %v63 = vsub.s32 0, %v62
    %v64 = vrot.slane %v59, %v63
    %v66 = vmul.f32 %v57, %v64
    %v67 = vmul.f32 %v58, %v64
    %v68 = vld [vmem:[%s2] sm:$0x1]
    %v70 = vlaneseq
    %v71 = vshrl.u32 %v70, 7
    %v72 = vsub.s32 0, %v71
    %v73 = vrot.slane %v68, %v72
    %v75 = vadd.f32 %v66, %v73
    %v76 = vadd.f32 %v67, %v73
    %v77 = vpack.c.bf16 %v76, %v75
    %v79 = vunpack.c.l.b16 %v77
    %v80 = vunpack.c.h.b16 %v77
    %v81 = vpack.c.b16 %v79, %v79
    %v82 = vpack.c.b16 %v80, %v80
    %vm85 = vcmask 257024
    %86 = vst.msk [vmem:[#allocation5] sm:$0xf] %vm85, %v81
    %87 = vst.msk [vmem:[#allocation5 + $0x4] sm:$0xf] %vm85, %v82
    // Predicated region
    $region18: #{tpu_custom_call.1} parent=1 // pred_check
      _
    $region19: #{tpu_custom_call.1} parent=1 // pred_check_branch
      %89 = sbr.rel (0) target = $region21
    $region20: #{tpu_custom_call.1} parent=1 // pred_region
      %s91 = ssub.s32 128, 128
      %92 = vsyncadd [#allocation4], %s91
      %s93 = sshll.u32 [#allocation5], 4
      %s94 = int_to_ptr.vmem [resolvable:$true] %s93
      %99 = dma.vmem_to_hbm [thread:$0]  %s94, 128, %s3, [#allocation4], 64, 64, 4
    $region21: #{tpu_custom_call.1} parent=1 // pred_fallthru
      _
    // Predicated region
    $region22: #{tpu_custom_call.1} parent=1 // pred_check
      _
    $region23: #{tpu_custom_call.1} parent=1 // pred_check_branch
      %101 = sbr.rel (0) target = $region25
    $region24: #{tpu_custom_call.1} parent=1 // pred_region
      %102 = dma.done [#allocation4], 128
    $region25: #{tpu_custom_call.1} parent=1 // pred_fallthru
      _
    %103 = vsyncpa [#allocation3], 1
    %104 = vsyncpa [#allocation4], 1

</llo_original>
